<compile_context>
chip_gen: v6e
topology: v6e:2x2x1
jax: 0.10.0
libtpu: 0.0.40
codegen_flags: <defaults>
</compile_context>

<pallas_src>
import functools

import jax
import jax.numpy as jnp
from jax.experimental import pallas as pl
from jax.experimental.pallas import tpu as pltpu


def _round_up(v: int, m: int) -> int:
    return (v + m - 1) // m * m


def _rbf_kernel(x_ref, out_ref, sq_ref, *, n: int, n_kernels: int,
                mul_factor: float, bandwidth, d_tail):
    """One D-tile of the RBF kernel-matrix computation.

    x_ref  : VMEM (Np, TK) native-dtype slice of the flattened samples
    out_ref: VMEM (Np, Np) f32; resident Gram accumulator, overwritten with the
             summed multi-bandwidth kernel matrix on the last grid step
    sq_ref : VMEM (Np, 1) f32; resident row-norm accumulator
    """
    k = pl.program_id(0)
    last = pl.num_programs(0) - 1

    @pl.when(k == 0)
    def _init():
        out_ref[...] = jnp.zeros_like(out_ref)
        sq_ref[...] = jnp.zeros_like(sq_ref)

    x = x_ref[...]
    if d_tail is not None:
        # The last tile extends past the (128-aligned) array end: zero the
        # out-of-bounds columns so they don't pollute the reductions.
        col = jax.lax.broadcasted_iota(jnp.int32, x.shape, 1)
        limit = jnp.where(k == last, d_tail, x.shape[1])
        x = jnp.where(col < limit, x, jnp.zeros_like(x))

    # MXU: accumulate x @ x.T directly into the resident output block.
    # Contracting the last dim of BOTH operands lowers to a transposed-RHS
    # matmul (no materialized x.T / per-step XLU relayout of the block).
    out_ref[...] += jax.lax.dot_general(
        x, x,
        dimension_numbers=(((1,), (1,)), ((), ())),
        preferred_element_type=jnp.float32,
    )

    # Row norms: cheap per-tile reduction, overlapped with the MXU/DMA work.
    xf = x.astype(jnp.float32)
    sq_ref[...] += jnp.sum(xf * xf, axis=1, keepdims=True)

    @pl.when(k == last)
    def _finalize():
        gram = out_ref[...]                       # (Np, Np) f32
        sq = sq_ref[...]                          # (Np, 1)  f32
        sq_row = jnp.transpose(sq)                # (1, Np)
        l2 = jnp.maximum(sq + sq_row - 2.0 * gram, 0.0)

        if bandwidth is None:
            # bandwidth = sum(L2 over the real NxN block) / (N^2 - N).
            # Padded rows of x are zero, so their gram / sq entries vanish and
            # the valid-block sum has the closed form 2*N*sum(sq) - 2*sum(G).
            l2_sum = 2.0 * (jnp.float32(n) * jnp.sum(sq) - jnp.sum(gram))
            # NOTE: n == 1 divides by zero, exactly like the PyTorch module.
            inv_bw = jnp.float32(n * n - n) / l2_sum
        else:
            inv_bw = jnp.float32(1.0 / float(bandwidth))

        mults = [float(mul_factor) ** (i - n_kernels // 2)
                 for i in range(n_kernels)]
        r_int = int(mul_factor) if float(mul_factor).is_integer() else 0

        if r_int >= 2 and n_kernels > 1:
            # Geometric multipliers: exp(-l2/(bw*m_j)) = base ** (m_max/m_j)
            # with base = exp(-l2/(bw*m_max)); the integer powers come from a
            # repeated-multiplication chain on the VPU -> one EUP exp total.
            m_max = max(mults)
            base = jnp.exp(l2 * (inv_bw * jnp.float32(-1.0 / m_max)))
            acc = base
            t = base
            for _ in range(n_kernels - 1):
                p = t
                for _ in range(r_int - 1):
                    p = p * t                     # t <- t ** mul_factor
                t = p
                acc = acc + t
        else:
            # General path: scalar multiply coefficients, no tensor divides.
            acc = jnp.zeros_like(l2)
            for m in mults:
                acc = acc + jnp.exp(l2 * (inv_bw * jnp.float32(-1.0 / m)))

        out_ref[...] = acc


def rbf_forward(x, *, n_kernels: int = 5, mul_factor: float = 2.0,
                bandwidth=None):
    """JAX/Pallas equivalent of RBF.forward.

    x: (N, ...) array (e.g. NCHW).  Returns an (N, N) float32 kernel matrix.
    """
    n = x.shape[0]
    xf = x.reshape(n, -1)
    # Keep sub-f32 inputs in their native dtype through the DMA (half the HBM
    # bytes; bf16 is also the MXU-native rate); accumulate in f32 in-kernel.
    if xf.dtype != jnp.float32 and xf.dtype != jnp.bfloat16:
        xf = xf.astype(jnp.float32)
    d = xf.shape[1]
    itemsize = jnp.dtype(xf.dtype).itemsize

    # Sublane alignment for the (Np, TK) input blocks; padded rows are zero and
    # drop out of the bandwidth sum analytically.
    sub = 8 if itemsize == 4 else 16
    n_pad = _round_up(max(n, sub), sub)
    # Lane alignment only -- do NOT pad D up to block_k (that would DMA and
    # matmul pure zeros); a partial last tile is masked in-kernel instead.
    d_pad = _round_up(max(d, 128), 128)

    # ---- Per-generation VMEM budget (v5e/v6e: 128 MiB, v7x: 64 MiB) --------
    try:
        phys_vmem = pltpu.get_tpu_info().vmem_capacity_bytes
    except Exception:
        phys_vmem = 64 * 1024 * 1024          # conservative (v7x-sized) default
    vmem_limit = min(phys_vmem * 3 // 4, 96 * 1024 * 1024)

    out_bytes = 4 * n_pad * n_pad             # resident Gram/output block
    sq_bytes = 4 * n_pad * 128                # (Np, 1) scratch, lane-padded
    epi_bytes = 3 * 4 * n_pad * n_pad         # epilogue f32 temporaries
    avail = vmem_limit - out_bytes - sq_bytes - epi_bytes - (2 << 20)

    # MiB-scale per-input-buffer budget (double buffered) so the per-grid-step
    # overhead is amortized; floor of one 128-lane tile.
    per_buf = min(4 << 20, max(avail // 2, 256 << 10))
    block_k = max(128, (per_buf // (itemsize * n_pad)) // 128 * 128)
    block_k = min(block_k, d_pad)

    grid_steps = (d_pad + block_k - 1) // block_k
    tail = d_pad - (grid_steps - 1) * block_k
    d_tail = tail if tail < block_k else None

    # Fast path: no extra HBM pad copy when the input is already aligned.
    if n_pad != n or d_pad != d:
        xf = jnp.pad(xf, ((0, n_pad - n), (0, d_pad - d)))

    in_block = (n_pad, block_k)
    buf_bytes = itemsize * n_pad * block_k
    if (grid_steps >= 4 and
            3 * buf_bytes + out_bytes + sq_bytes + epi_bytes + (1 << 20) < vmem_limit):
        # Deeper buffering hides DMA issue latency when each step is short.
        in_spec = pl.BlockSpec(in_block, lambda k: (0, k),
                               pipeline_mode=pl.Buffered(3))
    else:
        in_spec = pl.BlockSpec(in_block, lambda k: (0, k))

    out = pl.pallas_call(
        functools.partial(_rbf_kernel, n=n, n_kernels=n_kernels,
                          mul_factor=mul_factor, bandwidth=bandwidth,
                          d_tail=d_tail),
        out_shape=jax.ShapeDtypeStruct((n_pad, n_pad), jnp.float32),
        grid_spec=pltpu.PrefetchScalarGridSpec(
            num_scalar_prefetch=0,
            grid=(grid_steps,),
            in_specs=[in_spec],
            out_specs=pl.BlockSpec((n_pad, n_pad), lambda k: (0, 0)),
            scratch_shapes=[pltpu.VMEM((n_pad, 1), jnp.float32)],
        ),
        compiler_params=pltpu.CompilerParams(
            dimension_semantics=("arbitrary",),
            vmem_limit_bytes=int(vmem_limit),
        ),
    )(xf)
    return out[:n, :n]


def _rbf_reference(x, *, n_kernels: int = 5, mul_factor: float = 2.0):
    """Pure-JAX reference mirroring the PyTorch module (bandwidth=None)."""
    n = x.shape[0]
    xf = x.reshape(n, -1).astype(jnp.float32)
    diff = xf[:, None, :] - xf[None, :, :]
    l2 = jnp.sum(diff * diff, axis=-1)
    bw = jnp.sum(l2) / (n * n - n)
    mults = (mul_factor ** (jnp.arange(n_kernels) - n_kernels // 2)).astype(
        jnp.float32)
    return jnp.sum(jnp.exp(-l2[None, ...] / (bw * mults)[:, None, None]), axis=0)


if __name__ == "__main__":
    key = jax.random.PRNGKey(0)
    # Small shapes: batch=8, channels=4, spatial=16 -> X_flat is (8, 1024)
    x = jax.random.normal(key, (8, 4, 16, 16), dtype=jnp.float32)

    out = jax.block_until_ready(rbf_forward(x))
    ref = _rbf_reference(x)

    assert out.shape == (8, 8), out.shape
    err = float(jnp.max(jnp.abs(out - ref)))
    assert jnp.allclose(out, ref, atol=2e-3, rtol=2e-3), f"max abs err {err}"
    print("KERNEL_OK")
</pallas_src>

<mosaic_0001>
module attributes {stable_mosaic.version = 11 : i64} {
  func.func @_rbf_kernel(%arg0: i32, %arg1: memref<8x1024xf32, #tpu.memory_space<vmem>>, %arg2: memref<8x8xf32, #tpu.memory_space<vmem>>, %arg3: memref<8x1xf32, #tpu.memory_space<vmem>>) attributes {dimension_semantics = [#tpu.dimension_semantics<arbitrary>], iteration_bounds = array<i64: 1>, scalar_prefetch = 0 : i64, scratch_operands = 1 : i64, tpu.core_type = #tpu.core_type<tc>, window_params = [{transform_indices = @transform_0, window_bounds = array<i64: 8, 1024>}, {pipeline_mode = #tpu.pipeline_mode<synchronous>, transform_indices = @transform_1, window_bounds = array<i64: 8, 8>}]} {
    %c0_i32 = arith.constant 0 : i32
    %0 = arith.cmpi eq, %arg0, %c0_i32 : i32
    %1 = arith.extui %0 : i1 to i32
    %c0_i32_0 = arith.constant 0 : i32
    %2 = arith.cmpi ne, %1, %c0_i32_0 : i32
    scf.if %2 {
      %cst_13 = arith.constant 0.000000e+00 : f32
      %17 = vector.broadcast %cst_13 : f32 to vector<8x8xf32>
      %c0_14 = arith.constant 0 : index
      %c0_15 = arith.constant 0 : index
      %18 = vector.load %arg2[%c0_14, %c0_15] : memref<8x8xf32, #tpu.memory_space<vmem>>, vector<8x8xf32>
      tpu.vector_store %arg2[%c0_14, %c0_15], %17 {strides = array<i32>} : memref<8x8xf32, #tpu.memory_space<vmem>>, vector<8x8xf32>,
      %cst_16 = arith.constant 0.000000e+00 : f32
      %19 = vector.broadcast %cst_16 : f32 to vector<8x1xf32>
      %c0_17 = arith.constant 0 : index
      %c0_18 = arith.constant 0 : index
      %20 = vector.load %arg3[%c0_17, %c0_18] : memref<8x1xf32, #tpu.memory_space<vmem>>, vector<8x1xf32>
      tpu.vector_store %arg3[%c0_17, %c0_18], %19 {strides = array<i32>} : memref<8x1xf32, #tpu.memory_space<vmem>>, vector<8x1xf32>,
    } else {
    }
    %c0 = arith.constant 0 : index
    %c0_1 = arith.constant 0 : index
    %3 = vector.load %arg1[%c0, %c0_1] : memref<8x1024xf32, #tpu.memory_space<vmem>>, vector<8x1024xf32>
    %c0_2 = arith.constant 0 : index
    %c0_3 = arith.constant 0 : index
    %4 = vector.load %arg2[%c0_2, %c0_3] : memref<8x8xf32, #tpu.memory_space<vmem>>, vector<8x8xf32>
    %cst = arith.constant dense<0.000000e+00> : vector<8x8xf32>
    %5 = tpu.matmul %3, %3, %cst {dimension_numbers = #tpu.dot_dimension_numbers<[1], [1], [0], [0], [0, 0, 1, 0], [], []>} : vector<8x1024xf32>, vector<8x1024xf32>, vector<8x8xf32> -> vector<8x8xf32>
    %6 = arith.addf %4, %5 : vector<8x8xf32>
    %c0_4 = arith.constant 0 : index
    %c0_5 = arith.constant 0 : index
    %7 = vector.load %arg2[%c0_4, %c0_5] : memref<8x8xf32, #tpu.memory_space<vmem>>, vector<8x8xf32>
    tpu.vector_store %arg2[%c0_4, %c0_5], %6 {strides = array<i32>} : memref<8x8xf32, #tpu.memory_space<vmem>>, vector<8x8xf32>,
    %c0_6 = arith.constant 0 : index
    %c0_7 = arith.constant 0 : index
    %8 = vector.load %arg3[%c0_6, %c0_7] : memref<8x1xf32, #tpu.memory_space<vmem>>, vector<8x1xf32>
    %9 = arith.mulf %3, %3 : vector<8x1024xf32>
    %cst_8 = arith.constant dense<0.000000e+00> : vector<8xf32>
    %10 = vector.multi_reduction <add>, %9, %cst_8 [1] : vector<8x1024xf32> to vector<8xf32>
    %11 = vector.shape_cast %10 : vector<8xf32> to vector<8x1xf32>
    %12 = arith.addf %8, %11 : vector<8x1xf32>
    %c0_9 = arith.constant 0 : index
    %c0_10 = arith.constant 0 : index
    %13 = vector.load %arg3[%c0_9, %c0_10] : memref<8x1xf32, #tpu.memory_space<vmem>>, vector<8x1xf32>
    tpu.vector_store %arg3[%c0_9, %c0_10], %12 {strides = array<i32>} : memref<8x1xf32, #tpu.memory_space<vmem>>, vector<8x1xf32>,
    %c0_i32_11 = arith.constant 0 : i32
    %14 = arith.cmpi eq, %arg0, %c0_i32_11 : i32
    %15 = arith.extui %14 : i1 to i32
    %c0_i32_12 = arith.constant 0 : i32
    %16 = arith.cmpi ne, %15, %c0_i32_12 : i32
    scf.if %16 {
      %c0_13 = arith.constant 0 : index
      %c0_14 = arith.constant 0 : index
      %17 = vector.load %arg2[%c0_13, %c0_14] : memref<8x8xf32, #tpu.memory_space<vmem>>, vector<8x8xf32>
      %c0_15 = arith.constant 0 : index
      %c0_16 = arith.constant 0 : index
      %18 = vector.load %arg3[%c0_15, %c0_16] : memref<8x1xf32, #tpu.memory_space<vmem>>, vector<8x1xf32>
      %19 = tpu.transpose %18, [1, 0] : vector<8x1xf32> -> vector<1x8xf32>
      %20 = vector.broadcast %18 : vector<8x1xf32> to vector<8x8xf32>
      %21 = vector.broadcast %19 : vector<1x8xf32> to vector<8x8xf32>
      %22 = arith.addf %20, %21 : vector<8x8xf32>
      %cst_17 = arith.constant 2.000000e+00 : f32
      %23 = vector.broadcast %cst_17 : f32 to vector<8x8xf32>
      %24 = arith.mulf %23, %17 : vector<8x8xf32>
      %25 = arith.subf %22, %24 : vector<8x8xf32>
      %cst_18 = arith.constant 0.000000e+00 : f32
      %26 = vector.broadcast %cst_18 : f32 to vector<8x8xf32>
      %27 = arith.maximumf %25, %26 : vector<8x8xf32>
      %28 = vector.shape_cast %18 : vector<8x1xf32> to vector<1x8x1xf32>
      %cst_19 = arith.constant dense<0.000000e+00> : vector<1xf32>
      %29 = vector.multi_reduction <add>, %28, %cst_19 [1, 2] : vector<1x8x1xf32> to vector<1xf32>
      %30 = vector.shape_cast %29 : vector<1xf32> to vector<1x1x1xf32>
      %31 = vector.extract %30[0, 0, 0] : f32 from vector<1x1x1xf32>
      %cst_20 = arith.constant 8.000000e+00 : f32
      %32 = arith.mulf %cst_20, %31 : f32
      %33 = vector.shape_cast %17 : vector<8x8xf32> to vector<1x8x8xf32>
      %cst_21 = arith.constant dense<0.000000e+00> : vector<1xf32>
      %34 = vector.multi_reduction <add>, %33, %cst_21 [1, 2] : vector<1x8x8xf32> to vector<1xf32>
      %35 = vector.shape_cast %34 : vector<1xf32> to vector<1x1x1xf32>
      %36 = vector.extract %35[0, 0, 0] : f32 from vector<1x1x1xf32>
      %37 = arith.subf %32, %36 : f32
      %cst_22 = arith.constant 2.000000e+00 : f32
      %38 = arith.mulf %cst_22, %37 : f32
      %cst_23 = arith.constant 5.600000e+01 : f32
      %39 = arith.divf %cst_23, %38 : f32
      %cst_24 = arith.constant -2.500000e-01 : f32
      %40 = arith.mulf %39, %cst_24 : f32
      %41 = vector.broadcast %40 : f32 to vector<8x8xf32>
      %42 = arith.mulf %27, %41 : vector<8x8xf32>
      %43 = math.exp %42 : vector<8x8xf32>
      %44 = arith.mulf %43, %43 : vector<8x8xf32>
      %45 = arith.addf %43, %44 : vector<8x8xf32>
      %46 = arith.mulf %44, %44 : vector<8x8xf32>
      %47 = arith.addf %45, %46 : vector<8x8xf32>
      %48 = arith.mulf %46, %46 : vector<8x8xf32>
      %49 = arith.addf %47, %48 : vector<8x8xf32>
      %50 = arith.mulf %48, %48 : vector<8x8xf32>
      %51 = arith.addf %49, %50 : vector<8x8xf32>
      %c0_25 = arith.constant 0 : index
      %c0_26 = arith.constant 0 : index
      %52 = vector.load %arg2[%c0_25, %c0_26] : memref<8x8xf32, #tpu.memory_space<vmem>>, vector<8x8xf32>
      tpu.vector_store %arg2[%c0_25, %c0_26], %51 {strides = array<i32>} : memref<8x8xf32, #tpu.memory_space<vmem>>, vector<8x8xf32>,
    } else {
    }
    return
  }
  func.func @transform_0(%arg0: i32) -> (i32, i32) {
    %c0_i32 = arith.constant 0 : i32
    %c0_i32_0 = arith.constant 0 : i32
    return %c0_i32, %arg0 : i32, i32
  }
  func.func @transform_1(%arg0: i32) -> (i32, i32) {
    %c0_i32 = arith.constant 0 : i32
    %c0_i32_0 = arith.constant 0 : i32
    %c0_i32_1 = arith.constant 0 : i32
    return %c0_i32, %c0_i32_0 : i32, i32
  }
}

</mosaic_0001>

<llo_original>
// kernel: tpu_custom_call.1
$region0: #{tpu_custom_call.1}
  #allocation0 [shape = 'u32[]', space=smem, size = 0x4, offset = 0x4, fixed_abs, tag = 'smem constant byte address 0x4 - core index']
  #allocation1 [shape = 'u32[144,128]{1,0:T(1,128)}', space=vmem, size = 0x12000, scoped, tag = 'internal scratch']
  #allocation2 [shape = 'f32[8,1]{1,0:T(8,128)}', space=vmem, size = 0x1000, scoped, tag = 'scratch operand']
  %s0 = inlined_call_operand.hbm [shape: f32[8,1024], index: 0, kind: input, shape index: {}]
  %s1 = inlined_call_operand.hbm [shape: f32[8,8], index: 1, kind: output, shape index: {}]
  %s2 = sld [smem:[#allocation0]]
  $region26: #{tpu_custom_call.1} parent=0
    _
  %s4 = ssub.s32 1, %s2
  %s5 = scalar_select 0, %s4, %s2
  $region1: #{tpu_custom_call.1} parent=0
    #allocation3 [shape = 'u8[32768]{0}', space=vmem, size = 0x8000, scoped, tag = 'input window, operand 0, single buffered']
    #allocation4 [shape = 's32[1]{0}', space=sflag, size = 0x4, scoped, tag = 'scoped memory for tpu_custom_call.1']
    #allocation5 [shape = 's32[1]{0}', space=sflag, size = 0x4, scoped, tag = 'scoped memory for tpu_custom_call.1']
    #allocation6 [shape = 'u8[4096]{0}', space=vmem, size = 0x1000, scoped, tag = 'output window, operand 0, single buffered']
    %6 = vsyncpa [#allocation4], 0
    %7 = vsyncpa [#allocation5], 0
    // Predicated region
    $region2: #{tpu_custom_call.1} parent=1 // pred_check
      _
    $region3: #{tpu_custom_call.1} parent=1 // pred_check_branch
      %9 = sbr.rel (0) target = $region5
    $region4: #{tpu_custom_call.1} parent=1 // pred_region
      %s11 = ssub.s32 1024, 1024
      %12 = vsyncadd [#allocation4], %s11
      %s14 = sshll.u32 [#allocation3], 4
      %s15 = int_to_ptr.vmem [resolvable:$true] %s14
      %17 = dma.hbm_to_vmem [thread:$0]  %s0, 1024, %s15, [#allocation4]
    $region5: #{tpu_custom_call.1} parent=1 // pred_fallthru
      _
    // Predicated region
    $region6: #{tpu_custom_call.1} parent=1 // pred_check
      _
    $region7: #{tpu_custom_call.1} parent=1 // pred_check_branch
      %19 = sbr.rel (0) target = $region9
    $region8: #{tpu_custom_call.1} parent=1 // pred_region
      %20 = dma.done [#allocation4], 1024
    $region9: #{tpu_custom_call.1} parent=1 // pred_fallthru
      _
    %p21 = scmp.eq.s32.totalorder 0, 0
    // Predicated region
    $region10: #{tpu_custom_call.1} parent=1 // pred_check
      %p22 = pneg %p21
    $region11: #{tpu_custom_call.1} parent=1 // pred_check_branch
      %24 = sbr.rel (%p22) target = $region13
    $region12: #{tpu_custom_call.1} parent=1 // pred_region
      %vm25 = vcmask 64512
      %26 = vst.msk [vmem:[#allocation6] sm:$0xff] %vm25, 0.0
      %vm27 = vcmask 7168
      %28 = vst.msk [vmem:[#allocation2] sm:$0xff] %vm27, 0.0
    $region13: #{tpu_custom_call.1} parent=1 // pred_fallthru
      _
    %v29 = vld [vmem:[#allocation3] sm:$0xff]
    %v30 = vld [vmem:[#allocation3 + $0x8] sm:$0xff]
    %v31 = vld [vmem:[#allocation3 + $0x10] sm:$0xff]
    %v32 = vld [vmem:[#allocation3 + $0x18] sm:$0xff]
    %v33 = vld [vmem:[#allocation3 + $0x20] sm:$0xff]
    %v34 = vld [vmem:[#allocation3 + $0x28] sm:$0xff]
    %v35 = vld [vmem:[#allocation3 + $0x30] sm:$0xff]
    %v36 = vld [vmem:[#allocation3 + $0x38] sm:$0xff]
    %v37 = vld [vmem:[#allocation6] sm:$0xff]
    %38 = vmatprep.subr.mxu0 0.0
    %39 = vmatpush1.xpose.msra.mxu0 0.0
    %40 = vmatprep.subr.mxu0 0.0
    %41 = vmatpush1.xpose.msra.mxu0 0.0
    %42 = vmatprep.subr.mxu0 0.0
    %43 = vmatpush1.xpose.msra.mxu0 0.0
    %44 = vmatprep.subr.mxu0 0.0
    %45 = vmatpush1.xpose.msra.mxu0 0.0
    %46 = vmatprep.subr.mxu0 0.0
    %47 = vmatpush1.xpose.msra.mxu0 0.0
    %48 = vmatprep.subr.mxu0 0.0
    %49 = vmatpush1.xpose.msra.mxu0 0.0
    %50 = vmatprep.subr.mxu0 0.0
    %51 = vmatpush1.xpose.msra.mxu0 0.0
    %52 = vmatprep.subr.mxu0 0.0
    %53 = vmatpush1.xpose.msra.mxu0 0.0
    %54 = vmatprep.subr.mxu0 0.0
    %55 = vmatpush1.xpose.msra.mxu0 0.0
    %56 = vmatprep.subr.mxu0 0.0
    %57 = vmatpush1.xpose.msra.mxu0 0.0
    %58 = vmatprep.subr.mxu0 0.0
    %59 = vmatpush1.xpose.msra.mxu0 0.0
    %60 = vmatprep.subr.mxu0 0.0
    %61 = vmatpush1.xpose.msra.mxu0 0.0
    %62 = vmatprep.subr.mxu0 0.0
    %63 = vmatpush1.xpose.msra.mxu0 0.0
    %64 = vmatprep.subr.mxu0 0.0
    %65 = vmatpush1.xpose.msra.mxu0 0.0
    %66 = vmatprep.subr.mxu0 0.0
    %67 = vmatpush1.xpose.msra.mxu0 0.0
    %68 = vmatprep.subr.mxu0 %v30
    %69 = vmatpush1.xpose.msra.mxu0 %v29
    %70 = vmatprep.subr.mxu0 0.0
    %71 = vmatpush2.xpose.msra.mxu0 0.0
    %72 = vmatprep.subr.mxu0 0.0
    %73 = vmatpush2.xpose.msra.mxu0 0.0
    %74 = vmatprep.subr.mxu0 0.0
    %75 = vmatpush2.xpose.msra.mxu0 0.0
    %76 = vmatprep.subr.mxu0 0.0
    %77 = vmatpush2.xpose.msra.mxu0 0.0
    %78 = vmatprep.subr.mxu0 0.0
    %79 = vmatpush2.xpose.msra.mxu0 0.0
    %80 = vmatprep.subr.mxu0 0.0
    %81 = vmatpush2.xpose.msra.mxu0 0.0
    %82 = vmatprep.subr.mxu0 0.0
    %83 = vmatpush2.xpose.msra.mxu0 0.0
    %84 = vmatprep.subr.mxu0 0.0
    %85 = vmatpush2.xpose.msra.mxu0 0.0
    %86 = vmatprep.subr.mxu0 0.0
    %87 = vmatpush2.xpose.msra.mxu0 0.0
    %88 = vmatprep.subr.mxu0 0.0
    %89 = vmatpush2.xpose.msra.mxu0 0.0
    %90 = vmatprep.subr.mxu0 0.0
    %91 = vmatpush2.xpose.msra.mxu0 0.0
    %92 = vmatprep.subr.mxu0 0.0
    %93 = vmatpush2.xpose.msra.mxu0 0.0
    %94 = vmatprep.subr.mxu0 0.0
    %95 = vmatpush2.xpose.msra.mxu0 0.0
    %96 = vmatprep.subr.mxu0 0.0
    %97 = vmatpush2.xpose.msra.mxu0 0.0
    %98 = vmatprep.subr.mxu0 0.0
    %99 = vmatpush2.xpose.msra.mxu0 0.0
    %100 = vmatprep.subr.mxu0 0.0
    %101 = vmatpush2.xpose.msra.mxu0 0.0
    %102 = vmatprep.mubr.f32.mxu0 %v30
    %103 = vmatmul.mubr.f32.gmra.mxu0 %v29
    %v104 = vpop.f32.mrf.mxu0
    %v105 = vadd.f32 0.0, %v104
    %v106 = vpop.f32.mrf.mxu0
    %107 = vdwg.mxu0
    %108 = vmatprep.subr.mxu0 0.0
    %109 = vmatpush1.xpose.msra.mxu0 0.0
    %110 = vmatprep.subr.mxu0 0.0
    %111 = vmatpush1.xpose.msra.mxu0 0.0
    %112 = vmatprep.subr.mxu0 0.0
    %113 = vmatpush1.xpose.msra.mxu0 0.0
    %114 = vmatprep.subr.mxu0 0.0
    %115 = vmatpush1.xpose.msra.mxu0 0.0
    %116 = vmatprep.subr.mxu0 0.0
    %117 = vmatpush1.xpose.msra.mxu0 0.0
    %118 = vmatprep.subr.mxu0 0.0
    %119 = vmatpush1.xpose.msra.mxu0 0.0
    %120 = vmatprep.subr.mxu0 0.0
    %121 = vmatpush1.xpose.msra.mxu0 0.0
    %122 = vmatprep.subr.mxu0 0.0
    %123 = vmatpush1.xpose.msra.mxu0 0.0
    %124 = vmatprep.subr.mxu0 0.0
    %125 = vmatpush1.xpose.msra.mxu0 0.0
    %126 = vmatprep.subr.mxu0 0.0
    %127 = vmatpush1.xpose.msra.mxu0 0.0
    %128 = vmatprep.subr.mxu0 0.0
    %129 = vmatpush1.xpose.msra.mxu0 0.0
    %130 = vmatprep.subr.mxu0 0.0
    %131 = vmatpush1.xpose.msra.mxu0 0.0
    %132 = vmatprep.subr.mxu0 0.0
    %133 = vmatpush1.xpose.msra.mxu0 0.0
    %134 = vmatprep.subr.mxu0 0.0
    %135 = vmatpush1.xpose.msra.mxu0 0.0
    %136 = vmatprep.subr.mxu0 0.0
    %137 = vmatpush1.xpose.msra.mxu0 0.0
    %138 = vmatprep.subr.mxu0 %v32
    %139 = vmatpush1.xpose.msra.mxu0 %v31
    %140 = vmatprep.subr.mxu0 0.0
    %141 = vmatpush2.xpose.msra.mxu0 0.0
    %142 = vmatprep.subr.mxu0 0.0
    %143 = vmatpush2.xpose.msra.mxu0 0.0
    %144 = vmatprep.subr.mxu0 0.0
    %145 = vmatpush2.xpose.msra.mxu0 0.0
    %146 = vmatprep.subr.mxu0 0.0
    %147 = vmatpush2.xpose.msra.mxu0 0.0
    %148 = vmatprep.subr.mxu0 0.0
    %149 = vmatpush2.xpose.msra.mxu0 0.0
    %150 = vmatprep.subr.mxu0 0.0
    %151 = vmatpush2.xpose.msra.mxu0 0.0
    %152 = vmatprep.subr.mxu0 0.0
    %153 = vmatpush2.xpose.msra.mxu0 0.0
    %154 = vmatprep.subr.mxu0 0.0
    %155 = vmatpush2.xpose.msra.mxu0 0.0
    %156 = vmatprep.subr.mxu0 0.0
    %157 = vmatpush2.xpose.msra.mxu0 0.0
    %158 = vmatprep.subr.mxu0 0.0
    %159 = vmatpush2.xpose.msra.mxu0 0.0
    %160 = vmatprep.subr.mxu0 0.0
    %161 = vmatpush2.xpose.msra.mxu0 0.0
    %162 = vmatprep.subr.mxu0 0.0
    %163 = vmatpush2.xpose.msra.mxu0 0.0
    %164 = vmatprep.subr.mxu0 0.0
    %165 = vmatpush2.xpose.msra.mxu0 0.0
    %166 = vmatprep.subr.mxu0 0.0
    %167 = vmatpush2.xpose.msra.mxu0 0.0
    %168 = vmatprep.subr.mxu0 0.0
    %169 = vmatpush2.xpose.msra.mxu0 0.0
    %170 = vmatprep.subr.mxu0 0.0
    %171 = vmatpush2.xpose.msra.mxu0 0.0
    %172 = vmatprep.mubr.f32.mxu0 %v32
    %173 = vmatmul.mubr.f32.gmra.mxu0 %v31
    %v174 = vpop.f32.mrf.mxu0
    %v175 = vadd.f32 %v105, %v174
    %v176 = vpop.f32.mrf.mxu0
    %177 = vdwg.mxu0
    %178 = vmatprep.subr.mxu0 0.0
    %179 = vmatpush1.xpose.msra.mxu0 0.0
    %180 = vmatprep.subr.mxu0 0.0
    %181 = vmatpush1.xpose.msra.mxu0 0.0
    %182 = vmatprep.subr.mxu0 0.0
    %183 = vmatpush1.xpose.msra.mxu0 0.0
    %184 = vmatprep.subr.mxu0 0.0
    %185 = vmatpush1.xpose.msra.mxu0 0.0
    %186 = vmatprep.subr.mxu0 0.0
    %187 = vmatpush1.xpose.msra.mxu0 0.0
    %188 = vmatprep.subr.mxu0 0.0
    %189 = vmatpush1.xpose.msra.mxu0 0.0
    %190 = vmatprep.subr.mxu0 0.0
    %191 = vmatpush1.xpose.msra.mxu0 0.0
    %192 = vmatprep.subr.mxu0 0.0
    %193 = vmatpush1.xpose.msra.mxu0 0.0
    %194 = vmatprep.subr.mxu0 0.0
    %195 = vmatpush1.xpose.msra.mxu0 0.0
    %196 = vmatprep.subr.mxu0 0.0
    %197 = vmatpush1.xpose.msra.mxu0 0.0
    %198 = vmatprep.subr.mxu0 0.0
    %199 = vmatpush1.xpose.msra.mxu0 0.0
    %200 = vmatprep.subr.mxu0 0.0
    %201 = vmatpush1.xpose.msra.mxu0 0.0
    %202 = vmatprep.subr.mxu0 0.0
    %203 = vmatpush1.xpose.msra.mxu0 0.0
    %204 = vmatprep.subr.mxu0 0.0
    %205 = vmatpush1.xpose.msra.mxu0 0.0
    %206 = vmatprep.subr.mxu0 0.0
    %207 = vmatpush1.xpose.msra.mxu0 0.0
    %208 = vmatprep.subr.mxu0 %v34
    %209 = vmatpush1.xpose.msra.mxu0 %v33
    %210 = vmatprep.subr.mxu0 0.0
    %211 = vmatpush2.xpose.msra.mxu0 0.0
    %212 = vmatprep.subr.mxu0 0.0
    %213 = vmatpush2.xpose.msra.mxu0 0.0
    %214 = vmatprep.subr.mxu0 0.0
    %215 = vmatpush2.xpose.msra.mxu0 0.0
    %216 = vmatprep.subr.mxu0 0.0
    %217 = vmatpush2.xpose.msra.mxu0 0.0
    %218 = vmatprep.subr.mxu0 0.0
    %219 = vmatpush2.xpose.msra.mxu0 0.0
    %220 = vmatprep.subr.mxu0 0.0
    %221 = vmatpush2.xpose.msra.mxu0 0.0
    %222 = vmatprep.subr.mxu0 0.0
    %223 = vmatpush2.xpose.msra.mxu0 0.0
    %224 = vmatprep.subr.mxu0 0.0
    %225 = vmatpush2.xpose.msra.mxu0 0.0
    %226 = vmatprep.subr.mxu0 0.0
    %227 = vmatpush2.xpose.msra.mxu0 0.0
    %228 = vmatprep.subr.mxu0 0.0
    %229 = vmatpush2.xpose.msra.mxu0 0.0
    %230 = vmatprep.subr.mxu0 0.0
    %231 = vmatpush2.xpose.msra.mxu0 0.0
    %232 = vmatprep.subr.mxu0 0.0
    %233 = vmatpush2.xpose.msra.mxu0 0.0
    %234 = vmatprep.subr.mxu0 0.0
    %235 = vmatpush2.xpose.msra.mxu0 0.0
    %236 = vmatprep.subr.mxu0 0.0
    %237 = vmatpush2.xpose.msra.mxu0 0.0
    %238 = vmatprep.subr.mxu0 0.0
    %239 = vmatpush2.xpose.msra.mxu0 0.0
    %240 = vmatprep.subr.mxu0 0.0
    %241 = vmatpush2.xpose.msra.mxu0 0.0
    %242 = vmatprep.mubr.f32.mxu0 %v34
    %243 = vmatmul.mubr.f32.gmra.mxu0 %v33
    %v244 = vpop.f32.mrf.mxu0
    %v245 = vadd.f32 %v175, %v244
    %v246 = vpop.f32.mrf.mxu0
    %247 = vdwg.mxu0
    %248 = vmatprep.subr.mxu0 0.0
    %249 = vmatpush1.xpose.msra.mxu0 0.0
    %250 = vmatprep.subr.mxu0 0.0
    %251 = vmatpush1.xpose.msra.mxu0 0.0
    %252 = vmatprep.subr.mxu0 0.0
    %253 = vmatpush1.xpose.msra.mxu0 0.0
    %254 = vmatprep.subr.mxu0 0.0
    %255 = vmatpush1.xpose.msra.mxu0 0.0
    %256 = vmatprep.subr.mxu0 0.0
    %257 = vmatpush1.xpose.msra.mxu0 0.0
    %258 = vmatprep.subr.mxu0 0.0
    %259 = vmatpush1.xpose.msra.mxu0 0.0
    %260 = vmatprep.subr.mxu0 0.0
    %261 = vmatpush1.xpose.msra.mxu0 0.0
    %262 = vmatprep.subr.mxu0 0.0
    %263 = vmatpush1.xpose.msra.mxu0 0.0
    %264 = vmatprep.subr.mxu0 0.0
    %265 = vmatpush1.xpose.msra.mxu0 0.0
    %266 = vmatprep.subr.mxu0 0.0
    %267 = vmatpush1.xpose.msra.mxu0 0.0
    %268 = vmatprep.subr.mxu0 0.0
    %269 = vmatpush1.xpose.msra.mxu0 0.0
    %270 = vmatprep.subr.mxu0 0.0
    %271 = vmatpush1.xpose.msra.mxu0 0.0
    %272 = vmatprep.subr.mxu0 0.0
    %273 = vmatpush1.xpose.msra.mxu0 0.0
    %274 = vmatprep.subr.mxu0 0.0
    %275 = vmatpush1.xpose.msra.mxu0 0.0
    %276 = vmatprep.subr.mxu0 0.0
    %277 = vmatpush1.xpose.msra.mxu0 0.0
    %278 = vmatprep.subr.mxu0 %v36
    %279 = vmatpush1.xpose.msra.mxu0 %v35
    %280 = vmatprep.subr.mxu0 0.0
    %281 = vmatpush2.xpose.msra.mxu0 0.0
    %282 = vmatprep.subr.mxu0 0.0
    %283 = vmatpush2.xpose.msra.mxu0 0.0
    %284 = vmatprep.subr.mxu0 0.0
    %285 = vmatpush2.xpose.msra.mxu0 0.0
    %286 = vmatprep.subr.mxu0 0.0
    %287 = vmatpush2.xpose.msra.mxu0 0.0
    %288 = vmatprep.subr.mxu0 0.0
    %289 = vmatpush2.xpose.msra.mxu0 0.0
    %290 = vmatprep.subr.mxu0 0.0
    %291 = vmatpush2.xpose.msra.mxu0 0.0
    %292 = vmatprep.subr.mxu0 0.0
    %293 = vmatpush2.xpose.msra.mxu0 0.0
    %294 = vmatprep.subr.mxu0 0.0
    %295 = vmatpush2.xpose.msra.mxu0 0.0
    %296 = vmatprep.subr.mxu0 0.0
    %297 = vmatpush2.xpose.msra.mxu0 0.0
    %298 = vmatprep.subr.mxu0 0.0
    %299 = vmatpush2.xpose.msra.mxu0 0.0
    %300 = vmatprep.subr.mxu0 0.0
    %301 = vmatpush2.xpose.msra.mxu0 0.0
    %302 = vmatprep.subr.mxu0 0.0
    %303 = vmatpush2.xpose.msra.mxu0 0.0
    %304 = vmatprep.subr.mxu0 0.0
    %305 = vmatpush2.xpose.msra.mxu0 0.0
    %306 = vmatprep.subr.mxu0 0.0
    %307 = vmatpush2.xpose.msra.mxu0 0.0
    %308 = vmatprep.subr.mxu0 0.0
    %309 = vmatpush2.xpose.msra.mxu0 0.0
    %310 = vmatprep.subr.mxu0 0.0
    %311 = vmatpush2.xpose.msra.mxu0 0.0
    %312 = vmatprep.mubr.f32.mxu0 %v36
    %313 = vmatmul.mubr.f32.gmra.mxu0 %v35
    %v314 = vpop.f32.mrf.mxu0
    %v315 = vadd.f32 %v245, %v314
    %v316 = vpop.f32.mrf.mxu0
    %317 = vdwg.mxu0
    %v318 = vadd.f32 %v37, %v315
    %vm319 = vcmask 64512
    %320 = vst.msk [vmem:[#allocation6] sm:$0xff] %vm319, %v318
    %v321 = vld [vmem:[#allocation2] sm:$0xff]
    %v322 = vmul.f32 %v29, %v29
    %v323 = vmul.f32 %v30, %v30
    %v324 = vmul.f32 %v31, %v31
    %v325 = vmul.f32 %v32, %v32
    %v326 = vmul.f32 %v33, %v33
    %v327 = vmul.f32 %v34, %v34
    %v328 = vmul.f32 %v35, %v35
    %v329 = vmul.f32 %v36, %v36
    %v330 = vadd.f32 %v322, %v323
    %v331 = vadd.f32 %v330, %v324
    %v332 = vadd.f32 %v331, %v325
    %v333 = vadd.f32 %v332, %v326
    %v334 = vadd.f32 %v333, %v327
    %v335 = vadd.f32 %v334, %v328
    %v336 = vadd.f32 %v335, %v329
    %337 = vadd.xlane.f32.xlu0 %v336
    %v338 = vpop.xlane.xlu0 %337
    %v339 = vadd.f32 %v321, %v338
    %vm340 = vcmask 7168
    %341 = vst.msk [vmem:[#allocation2] sm:$0xff] %vm340, %v339
    // Predicated region
    $region14: #{tpu_custom_call.1} parent=1 // pred_check
      %p342 = pneg %p21
    $region15: #{tpu_custom_call.1} parent=1 // pred_check_branch
      %344 = sbr.rel (%p342) target = $region17
    $region16: #{tpu_custom_call.1} parent=1 // pred_region
      %v345 = vld [vmem:[#allocation6] sm:$0xff]
      %v346 = vld [vmem:[#allocation2] sm:$0xff]
      %347 = vxpose.xlu0.b32.start [1/16] %v346, 128
      %348 = vxpose.xlu0.b32.cont [2/16] 0.0, 128
      %349 = vxpose.xlu0.b32.cont [3/16] 0.0, 128
      %350 = vxpose.xlu0.b32.cont [4/16] 0.0, 128
      %351 = vxpose.xlu0.b32.cont [5/16] 0.0, 128
      %352 = vxpose.xlu0.b32.cont [6/16] 0.0, 128
      %353 = vxpose.xlu0.b32.cont [7/16] 0.0, 128
      %354 = vxpose.xlu0.b32.cont [8/16] 0.0, 128
      %355 = vxpose.xlu0.b32.cont [9/16] 0.0, 128
      %356 = vxpose.xlu0.b32.cont [10/16] 0.0, 128
      %357 = vxpose.xlu0.b32.cont [11/16] 0.0, 128
      %358 = vxpose.xlu0.b32.cont [12/16] 0.0, 128
      %359 = vxpose.xlu0.b32.cont [13/16] 0.0, 128
      %360 = vxpose.xlu0.b32.cont [14/16] 0.0, 128
      %361 = vxpose.xlu0.b32.cont [15/16] 0.0, 128
      %362 = vxpose.xlu0.b32.end [16/16] 0.0, 128
      %v363 = vpop.trf.xlu0
      %v364 = vpop.trf.xlu0
      %v365 = vpop.trf.xlu0
      %v366 = vpop.trf.xlu0
      %v367 = vpop.trf.xlu0
      %v368 = vpop.trf.xlu0
      %v369 = vpop.trf.xlu0
      %v370 = vpop.trf.xlu0
      %v371 = vpop.trf.xlu0
      %v372 = vpop.trf.xlu0
      %v373 = vpop.trf.xlu0
      %v374 = vpop.trf.xlu0
      %v375 = vpop.trf.xlu0
      %v376 = vpop.trf.xlu0
      %v377 = vpop.trf.xlu0
      %v378 = vpop.trf.xlu0
      %380 = vset.pattern.permute.xlu0 0
      %381 = vperm.xlu0 %380, %v346
      %v382 = vpop.permute.xlu0 %381
      %v384 = vlaneseq
      %v385 = vshrl.u32 %v384, 7
      %v386 = vsub.s32 0, %v385
      %v387 = vrot.slane %v363, %v386
      %v388 = vadd.f32 %v382, %v387
      %v389 = vmul.f32 %v345, 2.0
      %v390 = vsub.f32 %v388, %v389
      %v391 = vmax.f32 %v390, 0.0
      %v392 = vsel %vm340, %v346, 0.0
      %393 = vadd.xlane.f32.xlu0 %v392
      %v394 = vpop.xlane.xlu0 %393
      %v395 = vrot.slane %v394, 4
      %v396 = vadd.f32 %v394, %v395
      %v397 = vrot.slane %v396, 2
      %v398 = vadd.f32 %v396, %v397
      %v399 = vrot.slane %v398, 1
      %v400 = vadd.f32 %v398, %v399
      %s401 = vtos %v400
      %s402 = smul.f32 %s401, 8.0
      %v403 = vsel %vm319, %v345, 0.0
      %404 = vadd.xlane.f32.xlu0 %v403
      %v405 = vpop.xlane.xlu0 %404
      %v406 = vrot.slane %v405, 4
      %v407 = vadd.f32 %v405, %v406
      %v408 = vrot.slane %v407, 2
      %v409 = vadd.f32 %v407, %v408
      %v410 = vrot.slane %v409, 1
      %v411 = vadd.f32 %v409, %v410
      %s412 = vtos %v411
      %s413 = ssub.f32 %s402, %s412
      %s414 = smul.f32 %s413, 2.0
      %v415 = vstv %s414
      %v416 = vrcp.pop %v415
      %s417 = vtos %v416
      %s418 = smul.f32 56.0, %s417
      %s419 = smul.f32 %s418, -0.25
      %v420 = vstv %s419
      %v421 = vmul.f32 %v391, %v420
      %v422 = vmul.f32 %v421, 1.442695
      %v423 = vpow.pop %v422
      %v424 = vmul.f32 %v423, %v423
      %v425 = vadd.f32 %v423, %v424
      %v426 = vmul.f32 %v424, %v424
      %v427 = vadd.f32 %v425, %v426
      %v428 = vmul.f32 %v426, %v426
      %v429 = vadd.f32 %v427, %v428
      %v430 = vmul.f32 %v428, %v428
      %v431 = vadd.f32 %v429, %v430
      %432 = vst.msk [vmem:[#allocation6] sm:$0xff] %vm319, %v431
    $region17: #{tpu_custom_call.1} parent=1 // pred_fallthru
      _
    // Predicated region
    $region18: #{tpu_custom_call.1} parent=1 // pred_check
      _
    $region19: #{tpu_custom_call.1} parent=1 // pred_check_branch
      %434 = sbr.rel (0) target = $region21
    $region20: #{tpu_custom_call.1} parent=1 // pred_region
      %s436 = ssub.s32 128, 128
      %437 = vsyncadd [#allocation5], %s436
      %s439 = sshll.u32 [#allocation6], 4
      %s440 = int_to_ptr.vmem [resolvable:$true] %s439
      %442 = dma.vmem_to_hbm [thread:$0]  %s440, 128, %s1, [#allocation5]
    $region21: #{tpu_custom_call.1} parent=1 // pred_fallthru
      _
    // Predicated region
    $region22: #{tpu_custom_call.1} parent=1 // pred_check
      _
    $region23: #{tpu_custom_call.1} parent=1 // pred_check_branch
      %444 = sbr.rel (0) target = $region25
    $region24: #{tpu_custom_call.1} parent=1 // pred_region
      %445 = dma.done [#allocation5], 128
    $region25: #{tpu_custom_call.1} parent=1 // pred_fallthru
      _
    %446 = vsyncpa [#allocation4], 1
    %447 = vsyncpa [#allocation5], 1

</llo_original>
